<compile_context>
chip_gen: v7x
topology: tpu7x:2x2x1
jax: 0.10.0
libtpu: 0.0.40
codegen_flags: <defaults>
</compile_context>

<pallas_src>
import jax
import jax.numpy as jnp
from jax.experimental import pallas as pl
from jax.experimental.pallas import tpu as pltpu

LANE = 128


def _round_up(v, m):
    return (v + m - 1) // m * m


def _vmem_capacity_bytes():
    """Physical per-core VMEM; falls back to 64 MiB (v7x, the smallest)."""
    try:
        return int(pltpu.get_tpu_info().vmem_capacity_bytes)
    except Exception:
        return 64 * 1024 * 1024


def _vmem_need_bytes(tm, n_pad, fph, fpo, resident_adj):
    """Rough kernel VMEM footprint (pipelined buffers counted double)."""
    adj = 2 * n_pad * n_pad * 2 if resident_adj else 2 * 2 * tm * n_pad
    xw1 = 2 * n_pad * fph * 2                # resident X@W1 (bf16)
    w2 = 2 * fph * fpo * 2
    bias = 2 * 8 * (fph + fpo) * 4           # (1, fp) blocks pad to 8 sublanes
    out = 2 * tm * fpo * 4
    s2 = n_pad * fpo * 2                     # scratch (single copy)
    return adj + xw1 + w2 + bias + out + s2


def _choose_tiling(n, fph, fpo, budget):
    """Pick (resident_adj, row_tile, padded_n) under a VMEM budget."""
    n_min = _round_up(n, LANE)
    # Resident adjacency (DMA'd once -> halves HBM traffic) with a large tile.
    for tm in (1024, 512, 256, 128):
        if tm > n_min:
            continue
        n_pad = _round_up(n, max(tm, LANE))
        if _vmem_need_bytes(tm, n_pad, fph, fpo, True) <= budget:
            return True, tm, n_pad
    # Streamed (tm, N) adjacency slabs: largest tile that fits.
    for tm in (1024, 512, 256, 128, 64, 32, 16):
        if tm > n_min:
            continue
        n_pad = _round_up(n, max(tm, LANE))
        if _vmem_need_bytes(tm, n_pad, fph, fpo, False) <= budget:
            return False, tm, n_pad
    # Last resort: smallest streamed tile (vmem_limit below is raised toward
    # physical capacity).
    return False, 16, _round_up(n, LANE)


def _make_gcn_kernel(resident_adj, tm):
    def kernel(adj_ref, xw1_ref, b1_ref, w2_ref, b2_ref, o_ref, s2_ref):
        phase = pl.program_id(0)   # 0: layer-1 agg + incremental H@W2, 1: layer-2 agg
        tile = pl.program_id(1)    # adjacency row tile
        row0 = pl.multiple_of(tile * tm, tm)

        def adj_rows():
            if resident_adj:                      # static (trace-time) branch
                return adj_ref[pl.ds(row0, tm), :]
            return adj_ref[...]

        # Guard for the flash-style output map: the output block never flushes
        # garbage even if the runtime writes block 0 back before phase 1.
        @pl.when(jnp.logical_and(phase == 0, tile == 0))
        def _():
            o_ref[...] = jnp.zeros_like(o_ref)

        @pl.when(phase == 0)
        def _():
            # h_tile = A[tile] @ (X@W1) + b1   (layer 1, this row tile only)
            agg = jnp.dot(adj_rows(), xw1_ref[...],
                          preferred_element_type=jnp.float32)
            h = (agg + b1_ref[...]).astype(jnp.bfloat16)
            # Incremental layer-2 projection, hidden under the adjacency DMA;
            # the hidden activation never leaves VMEM / is never materialized.
            hw2 = jnp.dot(h, w2_ref[...], preferred_element_type=jnp.float32)
            s2_ref[pl.ds(row0, tm), :] = hw2.astype(s2_ref.dtype)

        @pl.when(phase == 1)
        def _():
            # out[tile] = relu(A[tile] @ (H@W2) + b2)
            agg = jnp.dot(adj_rows(), s2_ref[...],
                          preferred_element_type=jnp.float32)
            o_ref[...] = jnp.maximum(agg + b2_ref[...], 0.0).astype(o_ref.dtype)

    return kernel


def simple_gcn_forward(adj, x, params, *, vmem_budget_bytes=None):
    """Fused Pallas forward of simple_gcn (two GCN layers + final ReLU).

    adj: [N, N] dense adjacency, x: [N, F_in], params: [(w1, b1), (w2, b2)].
    """
    (w1, b1), (w2, b2) = params
    n = adj.shape[0]
    f_in, f_hid = w1.shape
    f_out = w2.shape[1]

    fph = _round_up(f_hid, LANE)   # padded hidden width
    fpo = _round_up(f_out, LANE)   # padded output width (kept separate)

    cap = _vmem_capacity_bytes()
    budget = vmem_budget_bytes if vmem_budget_bytes is not None else int(cap * 0.75)
    resident_adj, tm, n_pad = _choose_tiling(n, fph, fpo, budget)
    n_tiles = n_pad // tm

    # Layer-1 feature projection hoisted out of the kernel (XLA matmul).
    xw1 = jnp.dot(x.astype(jnp.float32), w1.astype(jnp.float32))

    # Lane-dense zero padding; padded rows/cols stay exactly zero through both
    # aggregations and the ReLU, so slicing them off at the end is exact.
    adj_p = jnp.zeros((n_pad, n_pad), jnp.bfloat16).at[:n, :n].set(adj.astype(jnp.bfloat16))
    xw1_p = jnp.zeros((n_pad, fph), jnp.bfloat16).at[:n, :f_hid].set(xw1.astype(jnp.bfloat16))
    b1_p = jnp.zeros((1, fph), jnp.float32).at[0, :f_hid].set(b1.astype(jnp.float32))
    w2_p = jnp.zeros((fph, fpo), jnp.bfloat16).at[:f_hid, :f_out].set(w2.astype(jnp.bfloat16))
    b2_p = jnp.zeros((1, fpo), jnp.float32).at[0, :f_out].set(b2.astype(jnp.float32))

    adj_reads = 1 if resident_adj else 2
    flops = 2 * n_pad * n_pad * fph + 2 * n_pad * fph * fpo + 2 * n_pad * n_pad * fpo
    bytes_accessed = (adj_reads * n_pad * n_pad * 2 + n_pad * fph * 2
                      + fph * fpo * 2 + (fph + fpo) * 4 + n_pad * fpo * 4)

    if resident_adj:
        adj_spec = pl.BlockSpec((n_pad, n_pad), lambda p, i: (0, 0))  # DMA'd once
    else:
        adj_spec = pl.BlockSpec((tm, n_pad), lambda p, i: (i, 0))     # streamed slabs

    out_p = pl.pallas_call(
        _make_gcn_kernel(resident_adj, tm),
        out_shape=jax.ShapeDtypeStruct((n_pad, fpo), jnp.float32),
        grid_spec=pltpu.PrefetchScalarGridSpec(
            num_scalar_prefetch=0,
            grid=(2, n_tiles),                                    # (layer phase, row tile)
            in_specs=[
                adj_spec,
                pl.BlockSpec((n_pad, fph), lambda p, i: (0, 0)),  # X@W1 (resident)
                pl.BlockSpec((1, fph), lambda p, i: (0, 0)),      # b1
                pl.BlockSpec((fph, fpo), lambda p, i: (0, 0)),    # W2
                pl.BlockSpec((1, fpo), lambda p, i: (0, 0)),      # b2
            ],
            # Output block stays at 0 through phase 0 (no final data produced),
            # then advances with the row tile in phase 1 where it is written.
            out_specs=pl.BlockSpec((tm, fpo), lambda p, i: (i * p, 0)),
            scratch_shapes=[
                pltpu.VMEM((n_pad, fpo), jnp.bfloat16),   # s2 = H@W2, carried phase 0 -> 1
            ],
        ),
        compiler_params=pltpu.CompilerParams(
            # Both axes carry sequential state through the VMEM scratch (phase 1
            # needs every phase-0 tile), so they must stay "arbitrary".
            dimension_semantics=("arbitrary", "arbitrary"),
            vmem_limit_bytes=int(cap * 0.9),
        ),
        cost_estimate=pl.CostEstimate(
            flops=flops, transcendentals=0, bytes_accessed=bytes_accessed),
    )(adj_p, xw1_p, b1_p, w2_p, b2_p)

    return out_p[:n, :f_out]


def simple_gcn_reference(adj, x, params):
    for w, b in params:
        x = adj @ (x @ w) + b
    return jnp.maximum(x, 0.0)


def _make_inputs(key, n, f_in, f_hid, f_out, density=0.1):
    k_adj, k_x, k_w1, k_b1, k_w2, k_b2 = jax.random.split(key, 6)
    a = (jax.random.uniform(k_adj, (n, n)) < density).astype(jnp.float32)
    a = jnp.maximum(a, a.T) + jnp.eye(n, dtype=jnp.float32)
    adj = a / jnp.sum(a, axis=1, keepdims=True)   # row-normalized, GCN-style
    x = jax.random.normal(k_x, (n, f_in), dtype=jnp.float32)
    params = [
        (0.1 * jax.random.normal(k_w1, (f_in, f_hid), dtype=jnp.float32),
         0.1 * jax.random.normal(k_b1, (f_hid,), dtype=jnp.float32)),
        (0.1 * jax.random.normal(k_w2, (f_hid, f_out), dtype=jnp.float32),
         0.1 * jax.random.normal(k_b2, (f_out,), dtype=jnp.float32)),
    ]
    return adj, x, params


if __name__ == "__main__":
    key = jax.random.PRNGKey(0)
    k1, k2 = jax.random.split(key)

    # Case 1: small graph -> resident-adjacency fast path (A DMA'd once).
    adj, x, params = _make_inputs(k1, n=64, f_in=32, f_hid=32, f_out=16)
    out = jax.block_until_ready(simple_gcn_forward(adj, x, params))
    ref = simple_gcn_reference(adj, x, params)
    assert out.shape == ref.shape
    # bf16 MXU inputs (f32 accumulation) -> loosened tolerance vs f32 reference.
    assert jnp.allclose(out, ref, atol=2e-2, rtol=2e-2), (
        float(jnp.max(jnp.abs(out - ref))))

    # Case 2: artificially tiny VMEM budget -> streamed (tm, N) adjacency slabs
    # over several row tiles (exercises the tiled / pipelined path).
    adj, x, params = _make_inputs(k2, n=256, f_in=64, f_hid=64, f_out=32)
    out = jax.block_until_ready(
        simple_gcn_forward(adj, x, params, vmem_budget_bytes=384 * 1024))
    ref = simple_gcn_reference(adj, x, params)
    assert out.shape == ref.shape
    assert jnp.allclose(out, ref, atol=2e-2, rtol=2e-2), (
        float(jnp.max(jnp.abs(out - ref))))

    print("KERNEL_OK")
</pallas_src>

<mosaic_0001>
module attributes {stable_mosaic.version = 11 : i64} {
  func.func @kernel(%arg0: i32, %arg1: i32, %arg2: memref<128x128xbf16, #tpu.memory_space<vmem>>, %arg3: memref<128x128xbf16, #tpu.memory_space<vmem>>, %arg4: memref<1x128xf32, #tpu.memory_space<vmem>>, %arg5: memref<128x128xbf16, #tpu.memory_space<vmem>>, %arg6: memref<1x128xf32, #tpu.memory_space<vmem>>, %arg7: memref<128x128xf32, #tpu.memory_space<vmem>>, %arg8: memref<128x128xbf16, #tpu.memory_space<vmem>>) attributes {dimension_semantics = [#tpu.dimension_semantics<arbitrary>, #tpu.dimension_semantics<arbitrary>], iteration_bounds = array<i64: 2, 1>, scalar_prefetch = 0 : i64, scratch_operands = 1 : i64, tpu.core_type = #tpu.core_type<tc>, window_params = [{pipeline_mode = #tpu.pipeline_mode<synchronous>, transform_indices = @transform_0, window_bounds = array<i64: 128, 128>}, {pipeline_mode = #tpu.pipeline_mode<synchronous>, transform_indices = @transform_1, window_bounds = array<i64: 128, 128>}, {pipeline_mode = #tpu.pipeline_mode<synchronous>, transform_indices = @transform_2, window_bounds = array<i64: 1, 128>}, {pipeline_mode = #tpu.pipeline_mode<synchronous>, transform_indices = @transform_3, window_bounds = array<i64: 128, 128>}, {pipeline_mode = #tpu.pipeline_mode<synchronous>, transform_indices = @transform_4, window_bounds = array<i64: 1, 128>}, {transform_indices = @transform_5, window_bounds = array<i64: 128, 128>}]} {
    %c128_i32 = arith.constant 128 : i32
    %0 = arith.muli %arg1, %c128_i32 : i32
    %1 = tpu.assume_multiple %0, 128 : i32
    %c0_i32 = arith.constant 0 : i32
    %2 = arith.cmpi eq, %arg0, %c0_i32 : i32
    %c0_i32_0 = arith.constant 0 : i32
    %3 = arith.cmpi eq, %arg1, %c0_i32_0 : i32
    %4 = arith.andi %2, %3 : i1
    %5 = arith.extui %4 : i1 to i32
    %c0_i32_1 = arith.constant 0 : i32
    %6 = arith.cmpi ne, %5, %c0_i32_1 : i32
    scf.if %6 {
      %cst = arith.constant 0.000000e+00 : f32
      %13 = vector.broadcast %cst : f32 to vector<128x128xf32>
      %c0 = arith.constant 0 : index
      %c0_5 = arith.constant 0 : index
      %14 = vector.load %arg7[%c0, %c0_5] : memref<128x128xf32, #tpu.memory_space<vmem>>, vector<128x128xf32>
      tpu.vector_store %arg7[%c0, %c0_5], %13 {strides = array<i32>} : memref<128x128xf32, #tpu.memory_space<vmem>>, vector<128x128xf32>,
    } else {
    }
    %c0_i32_2 = arith.constant 0 : i32
    %7 = arith.cmpi eq, %arg0, %c0_i32_2 : i32
    %8 = arith.extui %7 : i1 to i32
    %c0_i32_3 = arith.constant 0 : i32
    %9 = arith.cmpi ne, %8, %c0_i32_3 : i32
    scf.if %9 {
      %13 = arith.index_cast %1 : i32 to index
      %c0 = arith.constant 0 : index
      %14 = vector.load %arg2[%13, %c0] : memref<128x128xbf16, #tpu.memory_space<vmem>>, vector<128x128xbf16>
      %c0_5 = arith.constant 0 : index
      %c0_6 = arith.constant 0 : index
      %15 = vector.load %arg3[%c0_5, %c0_6] : memref<128x128xbf16, #tpu.memory_space<vmem>>, vector<128x128xbf16>
      %cst = arith.constant dense<0.000000e+00> : vector<128x128xf32>
      %16 = tpu.matmul %14, %15, %cst {dimension_numbers = #tpu.dot_dimension_numbers<[1], [0], [0], [1], [0, 0, 1, 1], [], []>} : vector<128x128xbf16>, vector<128x128xbf16>, vector<128x128xf32> -> vector<128x128xf32>
      %c0_7 = arith.constant 0 : index
      %c0_8 = arith.constant 0 : index
      %17 = vector.load %arg4[%c0_7, %c0_8] : memref<1x128xf32, #tpu.memory_space<vmem>>, vector<1x128xf32>
      %18 = vector.broadcast %17 : vector<1x128xf32> to vector<128x128xf32>
      %19 = arith.addf %16, %18 : vector<128x128xf32>
      %20 = arith.truncf %19 : vector<128x128xf32> to vector<128x128xbf16>
      %c0_9 = arith.constant 0 : index
      %c0_10 = arith.constant 0 : index
      %21 = vector.load %arg5[%c0_9, %c0_10] : memref<128x128xbf16, #tpu.memory_space<vmem>>, vector<128x128xbf16>
      %cst_11 = arith.constant dense<0.000000e+00> : vector<128x128xf32>
      %22 = tpu.matmul %20, %21, %cst_11 {dimension_numbers = #tpu.dot_dimension_numbers<[1], [0], [0], [1], [0, 0, 1, 1], [], []>} : vector<128x128xbf16>, vector<128x128xbf16>, vector<128x128xf32> -> vector<128x128xf32>
      %23 = arith.truncf %22 : vector<128x128xf32> to vector<128x128xbf16>
      %24 = arith.index_cast %1 : i32 to index
      %c0_12 = arith.constant 0 : index
      %25 = vector.load %arg8[%24, %c0_12] : memref<128x128xbf16, #tpu.memory_space<vmem>>, vector<128x128xbf16>
      tpu.vector_store %arg8[%24, %c0_12], %23 {strides = array<i32>} : memref<128x128xbf16, #tpu.memory_space<vmem>>, vector<128x128xbf16>,
    } else {
    }
    %c1_i32 = arith.constant 1 : i32
    %10 = arith.cmpi eq, %arg0, %c1_i32 : i32
    %11 = arith.extui %10 : i1 to i32
    %c0_i32_4 = arith.constant 0 : i32
    %12 = arith.cmpi ne, %11, %c0_i32_4 : i32
    scf.if %12 {
      %13 = arith.index_cast %1 : i32 to index
      %c0 = arith.constant 0 : index
      %14 = vector.load %arg2[%13, %c0] : memref<128x128xbf16, #tpu.memory_space<vmem>>, vector<128x128xbf16>
      %c0_5 = arith.constant 0 : index
      %c0_6 = arith.constant 0 : index
      %15 = vector.load %arg8[%c0_5, %c0_6] : memref<128x128xbf16, #tpu.memory_space<vmem>>, vector<128x128xbf16>
      %cst = arith.constant dense<0.000000e+00> : vector<128x128xf32>
      %16 = tpu.matmul %14, %15, %cst {dimension_numbers = #tpu.dot_dimension_numbers<[1], [0], [0], [1], [0, 0, 1, 1], [], []>} : vector<128x128xbf16>, vector<128x128xbf16>, vector<128x128xf32> -> vector<128x128xf32>
      %c0_7 = arith.constant 0 : index
      %c0_8 = arith.constant 0 : index
      %17 = vector.load %arg6[%c0_7, %c0_8] : memref<1x128xf32, #tpu.memory_space<vmem>>, vector<1x128xf32>
      %18 = vector.broadcast %17 : vector<1x128xf32> to vector<128x128xf32>
      %19 = arith.addf %16, %18 : vector<128x128xf32>
      %cst_9 = arith.constant 0.000000e+00 : f32
      %20 = vector.broadcast %cst_9 : f32 to vector<128x128xf32>
      %21 = arith.maximumf %19, %20 : vector<128x128xf32>
      %c0_10 = arith.constant 0 : index
      %c0_11 = arith.constant 0 : index
      %22 = vector.load %arg7[%c0_10, %c0_11] : memref<128x128xf32, #tpu.memory_space<vmem>>, vector<128x128xf32>
      tpu.vector_store %arg7[%c0_10, %c0_11], %21 {strides = array<i32>} : memref<128x128xf32, #tpu.memory_space<vmem>>, vector<128x128xf32>,
    } else {
    }
    return
  }
  func.func @transform_0(%arg0: i32, %arg1: i32) -> (i32, i32) {
    %c0_i32 = arith.constant 0 : i32
    %c0_i32_0 = arith.constant 0 : i32
    %c0_i32_1 = arith.constant 0 : i32
    return %c0_i32, %c0_i32_0 : i32, i32
  }
  func.func @transform_1(%arg0: i32, %arg1: i32) -> (i32, i32) {
    %c0_i32 = arith.constant 0 : i32
    %c0_i32_0 = arith.constant 0 : i32
    %c0_i32_1 = arith.constant 0 : i32
    return %c0_i32, %c0_i32_0 : i32, i32
  }
  func.func @transform_2(%arg0: i32, %arg1: i32) -> (i32, i32) {
    %c0_i32 = arith.constant 0 : i32
    %c0_i32_0 = arith.constant 0 : i32
    %c0_i32_1 = arith.constant 0 : i32
    return %c0_i32, %c0_i32_0 : i32, i32
  }
  func.func @transform_3(%arg0: i32, %arg1: i32) -> (i32, i32) {
    %c0_i32 = arith.constant 0 : i32
    %c0_i32_0 = arith.constant 0 : i32
    %c0_i32_1 = arith.constant 0 : i32
    return %c0_i32, %c0_i32_0 : i32, i32
  }
  func.func @transform_4(%arg0: i32, %arg1: i32) -> (i32, i32) {
    %c0_i32 = arith.constant 0 : i32
    %c0_i32_0 = arith.constant 0 : i32
    %c0_i32_1 = arith.constant 0 : i32
    return %c0_i32, %c0_i32_0 : i32, i32
  }
  func.func @transform_5(%arg0: i32, %arg1: i32) -> (i32, i32) {
    %0 = arith.muli %arg1, %arg0 : i32
    %c0_i32 = arith.constant 0 : i32
    %c0_i32_0 = arith.constant 0 : i32
    return %0, %c0_i32 : i32, i32
  }
}

</mosaic_0001>

<llo_original>
// kernel: tpu_custom_call.1
$region0: #{tpu_custom_call.1}
  #allocation0 [shape = 'u32[]', space=smem, size = 0x4, offset = 0x4, fixed_abs, tag = 'smem constant byte address 0x4 - core index']
  #allocation1 [shape = 'u32[144,128]{1,0:T(1,128)}', space=vmem, size = 0x12000, scoped, tag = 'internal scratch']
  #allocation2 [shape = 'bf16[128,128]{1,0:T(16,128)(2,1)}', space=vmem, size = 0x8000, scoped, tag = 'scratch operand']
  %s0 = inlined_call_operand.hbm [shape: bf16[128,128], index: 0, kind: input, shape index: {}]
  %s1 = inlined_call_operand.hbm [shape: bf16[128,128], index: 1, kind: input, shape index: {}]
  %s2 = inlined_call_operand.vmem [shape: f32[1,128], index: 2, kind: input, shape index: {}]
  %s3 = inlined_call_operand.hbm [shape: bf16[128,128], index: 3, kind: input, shape index: {}]
  %s4 = inlined_call_operand.vmem [shape: f32[1,128], index: 4, kind: input, shape index: {}]
  %s5 = inlined_call_operand.hbm [shape: f32[128,128], index: 5, kind: output, shape index: {}]
  %s6 = sld [smem:[#allocation0]]
  $region77: #{tpu_custom_call.1} parent=0
    _
  %s8 = ssub.s32 1, %s6
  %s9 = scalar_select 0, %s8, %s6
  $region1: #{tpu_custom_call.1} parent=0
    #allocation3 [shape = 'u8[32768]{0}', space=vmem, size = 0x8000, scoped, tag = 'input window, operand 0, single buffered']
    #allocation4 [shape = 's32[2]{0}', space=sflag, size = 0x8, scoped, tag = 'scoped memory for tpu_custom_call.1']
    #allocation5 [shape = 's32[2]{0}', space=sflag, size = 0x8, scoped, tag = 'scoped memory for tpu_custom_call.1']
    #allocation6 [shape = 'u8[32768]{0}', space=vmem, size = 0x8000, scoped, tag = 'input window, operand 1, single buffered']
    #allocation7 [shape = 's32[1]{0}', space=sflag, size = 0x4, scoped, tag = 'scoped memory for tpu_custom_call.1']
    #allocation8 [shape = 'u8[32768]{0}', space=vmem, size = 0x8000, scoped, tag = 'input window, operand 3, single buffered']
    #allocation9 [shape = 'u8[131072]{0}', space=vmem, size = 0x20000, scoped, tag = 'output window, operand 0']
    %10 = vsyncpa [#allocation4], 0
    %11 = vsyncpa [#allocation7], 0
    %12 = vsyncpa [#allocation5], 0
    %s13 = scalar_lea.sflag [#allocation5], 1
    %14 = vsyncpa %s13, 0
    loop: start=0, step=1, limit=4
    $region2: #{tpu_custom_call.1} parent=1 // loop_pre_header
      _
    $region3: #{tpu_custom_call.1} parent=1 // loop_header
      %s16 = sphi 0, %s20
      %p17 = scmp.ge.s32.totalorder %s16, 4
      %s23 = sphi 0, %s35
      %s24 = sphi 0, %s31
      %s25 = sphi 0, %s23
      %s26 = sphi 0, %s24
      %s27 = sphi 0, %s25
      %s28 = sphi 0, %s26
      %s36 = sphi 0, %s36
      %s38 = sphi 0, %s36
      %s39 = sphi 0, %s38
      %s53 = sphi 0, %s39
      %s57 = sphi 0, %s57
      %s59 = sphi 0, %s57
      %s60 = sphi 0, %s59
      %s74 = sphi 0, %s60
      %s78 = sphi 0, %s78
      %s80 = sphi 0, %s78
      %s81 = sphi 0, %s80
      %s95 = sphi 0, %s81
      %s99 = sphi 0, %s99
      %s101 = sphi 0, %s99
      %s102 = sphi 0, %s101
      %s116 = sphi 0, %s102
      %s120 = sphi 0, %s120
      %s122 = sphi 0, %s120
      %s123 = sphi 0, %s122
      %s137 = sphi 0, %s123
      %s145 = sphi 0, %s147
      %s148 = sphi 0, %s145
      %s149 = sphi 0, %s148
      %s165 = sphi 0, %s149
    $region4: #{tpu_custom_call.1} parent=1 // loop_header_branch
      %19 = sbr.rel (%p17) target = $region8
    $region5: #{tpu_custom_call.1} parent=1 // loop_body
      %s21 = ssub.s32 %s16, 1
      %s22 = ssub.s32 %s16, 2
      %s29 = sadd.s32 1, %s24
      %p30 = scmp.ge.s32.totalorder %s29, 1
      %s31 = scalar_select %p30, 0, %s29
      %s32 = sadd.s32 1, %s23
      %s33 = scalar_select %p30, %s32, %s23
      %p34 = scmp.ge.s32.totalorder %s33, 2
      %s35 = scalar_select %p34, 0, %s33
      %s37 = sadd.s32 %s36, 1
      %p40 = scmp.eq.s32.totalorder %s16, 1
      %p41 = scmp.ne.s32.totalorder %s36, %s38
      %p42 = scmp.eq.s32.totalorder %s16, 0
      %p43 = por %p41, %p42
      %p44 = scmp.ne.s32.totalorder %s36, %s38
      %p45 = scmp.eq.s32.totalorder %s21, 1
      %p46 = por %p44, %p45
      %p47 = scmp.ne.s32.totalorder %s38, %s39
      %p48 = scmp.eq.s32.totalorder %s21, 0
      %p49 = por %p47, %p48
      %p50 = scmp.ne.s32.totalorder %s38, %s39
      %p51 = scmp.eq.s32.totalorder %s22, 1
      %p52 = por %p50, %p51
      %p54 = scmp.ne.s32.totalorder %s39, %s53
      %p55 = scmp.eq.s32.totalorder %s22, 0
      %p56 = por %p54, %p55
      %s58 = sadd.s32 %s57, 1
      %p61 = scmp.eq.s32.totalorder %s16, 1
      %p62 = scmp.ne.s32.totalorder %s57, %s59
      %p63 = scmp.eq.s32.totalorder %s16, 0
      %p64 = por %p62, %p63
      %p65 = scmp.ne.s32.totalorder %s57, %s59
      %p66 = scmp.eq.s32.totalorder %s21, 1
      %p67 = por %p65, %p66
      %p68 = scmp.ne.s32.totalorder %s59, %s60
      %p69 = scmp.eq.s32.totalorder %s21, 0
      %p70 = por %p68, %p69
      %p71 = scmp.ne.s32.totalorder %s59, %s60
      %p72 = scmp.eq.s32.totalorder %s22, 1
      %p73 = por %p71, %p72
      %p75 = scmp.ne.s32.totalorder %s60, %s74
      %p76 = scmp.eq.s32.totalorder %s22, 0
      %p77 = por %p75, %p76
      %s79 = sadd.s32 %s78, 1
      %p82 = scmp.eq.s32.totalorder %s16, 1
      %p83 = scmp.ne.s32.totalorder %s78, %s80
      %p84 = scmp.eq.s32.totalorder %s16, 0
      %p85 = por %p83, %p84
      %p86 = scmp.ne.s32.totalorder %s78, %s80
      %p87 = scmp.eq.s32.totalorder %s21, 1
      %p88 = por %p86, %p87
      %p89 = scmp.ne.s32.totalorder %s80, %s81
      %p90 = scmp.eq.s32.totalorder %s21, 0
      %p91 = por %p89, %p90
      %p92 = scmp.ne.s32.totalorder %s80, %s81
      %p93 = scmp.eq.s32.totalorder %s22, 1
      %p94 = por %p92, %p93
      %p96 = scmp.ne.s32.totalorder %s81, %s95
      %p97 = scmp.eq.s32.totalorder %s22, 0
      %p98 = por %p96, %p97
      %s100 = sadd.s32 %s99, 1
      %p103 = scmp.eq.s32.totalorder %s16, 1
      %p104 = scmp.ne.s32.totalorder %s99, %s101
      %p105 = scmp.eq.s32.totalorder %s16, 0
      %p106 = por %p104, %p105
      %p107 = scmp.ne.s32.totalorder %s99, %s101
      %p108 = scmp.eq.s32.totalorder %s21, 1
      %p109 = por %p107, %p108
      %p110 = scmp.ne.s32.totalorder %s101, %s102
      %p111 = scmp.eq.s32.totalorder %s21, 0
      %p112 = por %p110, %p111
      %p113 = scmp.ne.s32.totalorder %s101, %s102
      %p114 = scmp.eq.s32.totalorder %s22, 1
      %p115 = por %p113, %p114
      %p117 = scmp.ne.s32.totalorder %s102, %s116
      %p118 = scmp.eq.s32.totalorder %s22, 0
      %p119 = por %p117, %p118
      %s121 = sadd.s32 %s120, 1
      %p124 = scmp.eq.s32.totalorder %s16, 1
      %p125 = scmp.ne.s32.totalorder %s120, %s122
      %p126 = scmp.eq.s32.totalorder %s16, 0
      %p127 = por %p125, %p126
      %p128 = scmp.ne.s32.totalorder %s120, %s122
      %p129 = scmp.eq.s32.totalorder %s21, 1
      %p130 = por %p128, %p129
      %p131 = scmp.ne.s32.totalorder %s122, %s123
      %p132 = scmp.eq.s32.totalorder %s21, 0
      %p133 = por %p131, %p132
      %p134 = scmp.ne.s32.totalorder %s122, %s123
      %p135 = scmp.eq.s32.totalorder %s22, 1
      %p136 = por %p134, %p135
      %p138 = scmp.ne.s32.totalorder %s123, %s137
      %p139 = scmp.eq.s32.totalorder %s22, 0
      %p140 = por %p138, %p139
      %s141 = smul.u32 %s24, %s23
      %s142 = smul.u32 %s31, %s35
      %s143 = ssub.s32 %s141, %s142
      %p144 = scmp.eq.s32.totalorder %s143, 0
      %s146 = sadd.s32 %s145, 1
      %s147 = scalar_select %p144, %s145, %s146
      %p150 = pneg %p144
      %p151 = scmp.eq.s32.totalorder %s16, 1
      %p152 = por %p150, %p151
      %p153 = scmp.ne.s32.totalorder %s145, %s148
      %p154 = scmp.eq.s32.totalorder %s16, 0
      %p155 = por %p153, %p154
      %p156 = scmp.ne.s32.totalorder %s145, %s148
      %p157 = scmp.eq.s32.totalorder %s21, 1
      %p158 = por %p156, %p157
      %p159 = scmp.ne.s32.totalorder %s148, %s149
      %p160 = scmp.eq.s32.totalorder %s21, 0
      %p161 = por %p159, %p160
      %p162 = scmp.ne.s32.totalorder %s148, %s149
      %p163 = scmp.eq.s32.totalorder %s22, 1
      %p164 = por %p162, %p163
      %p166 = scmp.ne.s32.totalorder %s149, %s165
      %p167 = scmp.eq.s32.totalorder %s22, 0
      %p168 = por %p166, %p167
      %p169 = scmp.le.s32.totalorder 1, %s16
      %p170 = scmp.lt.s32.totalorder %s16, 3
      %p171 = pnand %p169, %p170
      %p172 = pneg %p171
      // Predicated region
      $region9: #{tpu_custom_call.1} parent=5 // pred_check
        _
      $region10: #{tpu_custom_call.1} parent=5 // pred_check_branch
        %174 = sbr.rel (%p171) target = $region12
      $region11: #{tpu_custom_call.1} parent=5 // pred_region
        %s175 = ssub.s32 %s16, 1
        // Predicated region
        $region13: #{tpu_custom_call.1} parent=11 // pred_check
          %p176 = pneg %p49
        $region14: #{tpu_custom_call.1} parent=11 // pred_check_branch
          %178 = sbr.rel (%p176) target = $region16
        $region15: #{tpu_custom_call.1} parent=11 // pred_region
          %s180 = ssub.s32 1024, 1024
          %181 = vsyncadd [#allocation4], %s180
          %s182 = sshll.u32 [#allocation3], 4
          %s183 = int_to_ptr.vmem [resolvable:$true] %s182
          %188 = dma.hbm_to_vmem [thread:$0]  %s0, 1024, %s183, [#allocation4], 64, 64, 4
        $region16: #{tpu_custom_call.1} parent=11 // pred_fallthru
          _
        // Predicated region
        $region17: #{tpu_custom_call.1} parent=11 // pred_check
          %p189 = pneg %p70
        $region18: #{tpu_custom_call.1} parent=11 // pred_check_branch
          %191 = sbr.rel (%p189) target = $region20
        $region19: #{tpu_custom_call.1} parent=11 // pred_region
          %s193 = ssub.s32 1024, 1024
          %194 = vsyncadd [#allocation7], %s193
          %s195 = sshll.u32 [#allocation6], 4
          %s196 = int_to_ptr.vmem [resolvable:$true] %s195
          %201 = dma.hbm_to_vmem [thread:$0]  %s1, 1024, %s196, [#allocation7], 64, 64, 4
        $region20: #{tpu_custom_call.1} parent=11 // pred_fallthru
          _
        // Predicated region
        $region21: #{tpu_custom_call.1} parent=11 // pred_check
          %p202 = pneg %p91
        $region22: #{tpu_custom_call.1} parent=11 // pred_check_branch
          %204 = sbr.rel (%p202) target = $region24
        $region23: #{tpu_custom_call.1} parent=11 // pred_region
          _
        $region24: #{tpu_custom_call.1} parent=11 // pred_fallthru
          _
        // Predicated region
        $region25: #{tpu_custom_call.1} parent=11 // pred_check
          %p205 = pneg %p112
        $region26: #{tpu_custom_call.1} parent=11 // pred_check_branch
          %207 = sbr.rel (%p205) target = $region28
        $region27: #{tpu_custom_call.1} parent=11 // pred_region
          %s209 = ssub.s32 1024, 1024
          %210 = vsyncadd [#allocation7], %s209
          %s211 = sshll.u32 [#allocation8], 4
          %s212 = int_to_ptr.vmem [resolvable:$true] %s211
          %217 = dma.hbm_to_vmem [thread:$0]  %s3, 1024, %s212, [#allocation7], 64, 64, 4
        $region28: #{tpu_custom_call.1} parent=11 // pred_fallthru
          _
        // Predicated region
        $region29: #{tpu_custom_call.1} parent=11 // pred_check
          %p218 = pneg %p133
        $region30: #{tpu_custom_call.1} parent=11 // pred_check_branch
          %220 = sbr.rel (%p218) target = $region32
        $region31: #{tpu_custom_call.1} parent=11 // pred_region
          _
        $region32: #{tpu_custom_call.1} parent=11 // pred_fallthru
          _
      $region12: #{tpu_custom_call.1} parent=5 // pred_fallthru
        _
      %p221 = scmp.lt.s32.totalorder %s16, 2
      // Predicated region
      $region33: #{tpu_custom_call.1} parent=5 // pred_check
        %p222 = pneg %p221
      $region34: #{tpu_custom_call.1} parent=5 // pred_check_branch
        %224 = sbr.rel (%p222) target = $region36
      $region35: #{tpu_custom_call.1} parent=5 // pred_region
        _
      $region36: #{tpu_custom_call.1} parent=5 // pred_fallthru
        _
      %p225 = scmp.le.s32.totalorder 1, %s16
      %p226 = scmp.lt.s32.totalorder %s16, 3
      %p227 = pnand %p225, %p226
      %p228 = pneg %p227
      // Predicated region
      $region37: #{tpu_custom_call.1} parent=5 // pred_check
        _
      $region38: #{tpu_custom_call.1} parent=5 // pred_check_branch
        %230 = sbr.rel (%p227) target = $region40
      $region39: #{tpu_custom_call.1} parent=5 // pred_region
        %s231 = ssub.s32 %s16, 1
        // Predicated region
        $region41: #{tpu_custom_call.1} parent=39 // pred_check
          %p232 = pneg %p49
        $region42: #{tpu_custom_call.1} parent=39 // pred_check_branch
          %234 = sbr.rel (%p232) target = $region44
        $region43: #{tpu_custom_call.1} parent=39 // pred_region
          %235 = dma.done [#allocation4], 1024
        $region44: #{tpu_custom_call.1} parent=39 // pred_fallthru
          _
        // Predicated region
        $region45: #{tpu_custom_call.1} parent=39 // pred_check
          %p236 = pneg %p70
        $region46: #{tpu_custom_call.1} parent=39 // pred_check_branch
          %238 = sbr.rel (%p236) target = $region48
        $region47: #{tpu_custom_call.1} parent=39 // pred_region
          %239 = dma.done [#allocation7], 1024
        $region48: #{tpu_custom_call.1} parent=39 // pred_fallthru
          _
        // Predicated region
        $region49: #{tpu_custom_call.1} parent=39 // pred_check
          %p240 = pneg %p112
        $region50: #{tpu_custom_call.1} parent=39 // pred_check_branch
          %242 = sbr.rel (%p240) target = $region52
        $region51: #{tpu_custom_call.1} parent=39 // pred_region
          %243 = dma.done [#allocation7], 1024
        $region52: #{tpu_custom_call.1} parent=39 // pred_fallthru
          _
        %p244 = pneg %p49
        %p245 = pneg %p46
        %p246 = pneg %p70
        %p247 = pneg %p67
        %p248 = pneg %p91
        %p249 = pneg %p88
        %p250 = pneg %p112
        %p251 = pneg %p109
        %p252 = pneg %p133
        %p253 = pneg %p130
        %p254 = pneg %p161
        %p255 = pneg %p158
        %s256 = sand.u32 %s148, 1
        %s257 = scalar_lea.sflag [#allocation5], %s256
        %s258 = sand.u32 %s148, 1
        %s259 = smul.addr %s258, 128
        %s260 = scalar_lea.vmem [#allocation9], %s259
        %s261 = smul.u32 %s26, %s25
        %s262 = smul.u32 16, %s261
        %s264 = smul.u32 %s26, 128
        %p265 = scmp.eq.s32.totalorder %s25, 0
        %p266 = scmp.eq.s32.totalorder %s26, 0
        %p267 = pnand %p265, %p266
        %p268 = pneg %p267
        // Predicated region
        $region53: #{tpu_custom_call.1} parent=39 // pred_check
          _
        $region54: #{tpu_custom_call.1} parent=39 // pred_check_branch
          %270 = sbr.rel (%p267) target = $region56
        $region55: #{tpu_custom_call.1} parent=39 // pred_region
          %271 = vst [vmem:[%s260] sm:$0xff] 0.0
          %272 = vst [vmem:[%s260 + $0x8] sm:$0xff] 0.0
          %273 = vst [vmem:[%s260 + $0x10] sm:$0xff] 0.0
          %274 = vst [vmem:[%s260 + $0x18] sm:$0xff] 0.0
          %275 = vst [vmem:[%s260 + $0x20] sm:$0xff] 0.0
          %276 = vst [vmem:[%s260 + $0x28] sm:$0xff] 0.0
          %277 = vst [vmem:[%s260 + $0x30] sm:$0xff] 0.0
          %278 = vst [vmem:[%s260 + $0x38] sm:$0xff] 0.0
          %279 = vst [vmem:[%s260 + $0x40] sm:$0xff] 0.0
          %280 = vst [vmem:[%s260 + $0x48] sm:$0xff] 0.0
          %281 = vst [vmem:[%s260 + $0x50] sm:$0xff] 0.0
          %282 = vst [vmem:[%s260 + $0x58] sm:$0xff] 0.0
          %283 = vst [vmem:[%s260 + $0x60] sm:$0xff] 0.0
          %284 = vst [vmem:[%s260 + $0x68] sm:$0xff] 0.0
          %285 = vst [vmem:[%s260 + $0x70] sm:$0xff] 0.0
          %286 = vst [vmem:[%s260 + $0x78] sm:$0xff] 0.0
        $region56: #{tpu_custom_call.1} parent=39 // pred_fallthru
          _
        // Predicated region
        $region57: #{tpu_custom_call.1} parent=39 // pred_check
          %p287 = pneg %p265
        $region58: #{tpu_custom_call.1} parent=39 // pred_check_branch
          %289 = sbr.rel (%p287) target = $region60
        $region59: #{tpu_custom_call.1} parent=39 // pred_region
          %s290 = sshra.s32 %s264, 3
          %s291 = sand.u32 %s264, 7
          %s292 = smul.addr %s290, 4
          %s293 = scalar_lea.vmem [#allocation3], %s292
          %v294 = vld [vmem:[%s293] sm:$0xf]
          %v295 = vld [vmem:[%s293 + $0x4] sm:$0xf]
          %v296 = vld [vmem:[%s293 + $0x8] sm:$0xf]
          %v297 = vld [vmem:[%s293 + $0xc] sm:$0xf]
          %v298 = vld [vmem:[%s293 + $0x10] sm:$0xf]
          %v299 = vld [vmem:[%s293 + $0x14] sm:$0xf]
          %v300 = vld [vmem:[%s293 + $0x18] sm:$0xf]
          %v301 = vld [vmem:[%s293 + $0x1c] sm:$0xf]
          %v302 = vld [vmem:[%s293 + $0x20] sm:$0xf]
          %v303 = vld [vmem:[%s293 + $0x24] sm:$0xf]
          %v304 = vld [vmem:[%s293 + $0x28] sm:$0xf]
          %v305 = vld [vmem:[%s293 + $0x2c] sm:$0xf]
          %v306 = vld [vmem:[%s293 + $0x30] sm:$0xf]
          %v307 = vld [vmem:[%s293 + $0x34] sm:$0xf]
          %v308 = vld [vmem:[%s293 + $0x38] sm:$0xf]
          %v309 = vld [vmem:[%s293 + $0x3c] sm:$0xf]
          %v310 = vld [vmem:[#allocation6] sm:$0xf]
          %v311 = vld [vmem:[#allocation6 + $0x4] sm:$0xf]
          %v312 = vld [vmem:[#allocation6 + $0x8] sm:$0xf]
          %v313 = vld [vmem:[#allocation6 + $0xc] sm:$0xf]
          %v314 = vld [vmem:[#allocation6 + $0x10] sm:$0xf]
          %v315 = vld [vmem:[#allocation6 + $0x14] sm:$0xf]
          %v316 = vld [vmem:[#allocation6 + $0x18] sm:$0xf]
          %v317 = vld [vmem:[#allocation6 + $0x1c] sm:$0xf]
          %v318 = vld [vmem:[#allocation6 + $0x20] sm:$0xf]
          %v319 = vld [vmem:[#allocation6 + $0x24] sm:$0xf]
          %v320 = vld [vmem:[#allocation6 + $0x28] sm:$0xf]
          %v321 = vld [vmem:[#allocation6 + $0x2c] sm:$0xf]
          %v322 = vld [vmem:[#allocation6 + $0x30] sm:$0xf]
          %v323 = vld [vmem:[#allocation6 + $0x34] sm:$0xf]
          %v324 = vld [vmem:[#allocation6 + $0x38] sm:$0xf]
          %v325 = vld [vmem:[#allocation6 + $0x3c] sm:$0xf]
          %v326 = vld [vmem:[%s2] sm:$0x1]
          %v328 = vlaneseq
          %v329 = vshrl.u32 %v328, 7
          %v330 = vsub.s32 0, %v329
          %v331 = vrot.slane %v326, %v330
          %v349 = vunpack.c.l.b16 %v294
          %v350 = vunpack.c.l.b16 %v295
          %v351 = vunpack.c.l.b16 %v296
          %v352 = vunpack.c.l.b16 %v297
          %v353 = vunpack.c.l.b16 %v298
          %v354 = vunpack.c.l.b16 %v299
          %v355 = vunpack.c.l.b16 %v300
          %v356 = vunpack.c.l.b16 %v301
          %v357 = vunpack.c.l.b16 %v302
          %v358 = vunpack.c.l.b16 %v303
          %v359 = vunpack.c.l.b16 %v304
          %v360 = vunpack.c.l.b16 %v305
          %v361 = vunpack.c.l.b16 %v306
          %v362 = vunpack.c.l.b16 %v307
          %v363 = vunpack.c.l.b16 %v308
          %v364 = vunpack.c.l.b16 %v309
          %v365 = vpack.c.b16 %v350, %v349
          %v366 = vpack.c.b16 %v352, %v351
          %v367 = vpack.c.b16 %v354, %v353
          %v368 = vpack.c.b16 %v356, %v355
          %v369 = vpack.c.b16 %v358, %v357
          %v370 = vpack.c.b16 %v360, %v359
          %v371 = vpack.c.b16 %v362, %v361
          %v372 = vpack.c.b16 %v364, %v363
          %v397 = vunpack.c.l.b16 %v310
          %v398 = vunpack.c.l.b16 %v311
          %v399 = vunpack.c.l.b16 %v312
          %v400 = vunpack.c.l.b16 %v313
          %v401 = vunpack.c.l.b16 %v314
          %v402 = vunpack.c.l.b16 %v315
          %v403 = vunpack.c.l.b16 %v316
          %v404 = vunpack.c.l.b16 %v317
          %v405 = vunpack.c.l.b16 %v318
          %v406 = vunpack.c.l.b16 %v319
          %v407 = vunpack.c.l.b16 %v320
          %v408 = vunpack.c.l.b16 %v321
          %v409 = vunpack.c.l.b16 %v322
          %v410 = vunpack.c.l.b16 %v323
          %v411 = vunpack.c.l.b16 %v324
          %v412 = vunpack.c.l.b16 %v325
          %v413 = vpack.c.b16 %v398, %v397
          %v414 = vpack.c.b16 %v400, %v399
          %v415 = vpack.c.b16 %v402, %v401
          %v416 = vpack.c.b16 %v404, %v403
          %v417 = vpack.c.b16 %v406, %v405
          %v418 = vpack.c.b16 %v408, %v407
          %v419 = vpack.c.b16 %v410, %v409
          %v420 = vpack.c.b16 %v412, %v411
          %429 = vmatprep.subr.bf16.mxu0 0
          %430 = vmatpush1.bf16.msra.mxu0 %v413
          %431 = vmatprep.subr.bf16.mxu0 0
          %432 = vmatpush1.bf16.msra.mxu0 %v414
          %433 = vmatprep.subr.bf16.mxu0 0
          %434 = vmatpush1.bf16.msra.mxu0 %v415
          %435 = vmatprep.subr.bf16.mxu0 0
          %436 = vmatpush1.bf16.msra.mxu0 %v416
          %437 = vmatprep.subr.bf16.mxu0 0
          %438 = vmatpush1.bf16.msra.mxu0 %v417
          %439 = vmatprep.subr.bf16.mxu0 0
          %440 = vmatpush1.bf16.msra.mxu0 %v418
          %441 = vmatprep.subr.bf16.mxu0 0
          %442 = vmatpush1.bf16.msra.mxu0 %v419
          %443 = vmatprep.subr.bf16.mxu0 0
          %444 = vmatpush1.bf16.msra.mxu0 %v420
          %445 = vmatprep.subr.bf16.mxu0 0
          %446 = vmatpush1.bf16.msra.mxu0 0
          %447 = vmatprep.subr.bf16.mxu0 0
          %448 = vmatpush1.bf16.msra.mxu0 0
          %449 = vmatprep.subr.bf16.mxu0 0
          %450 = vmatpush1.bf16.msra.mxu0 0
          %451 = vmatprep.subr.bf16.mxu0 0
          %452 = vmatpush1.bf16.msra.mxu0 0
          %453 = vmatprep.subr.bf16.mxu0 0
          %454 = vmatpush1.bf16.msra.mxu0 0
          %455 = vmatprep.subr.bf16.mxu0 0
          %456 = vmatpush1.bf16.msra.mxu0 0
          %457 = vmatprep.subr.bf16.mxu0 0
          %458 = vmatpush1.bf16.msra.mxu0 0
          %459 = vmatprep.subr.bf16.mxu0 0
          %460 = vmatpush1.bf16.msra.mxu0 0
          %461 = vmatprep.mubr.bf16.mxu0 0
          %462 = vmatmul.mubr.bf16.gmra.mrb[0].mxu0 %v365
          %v463 = vpop.f32.mrb[0].mxu0
          %v464 = vadd.f32 %v331, %v463
          %v465 = vpop.f32.mrb[0].mxu0
          %v466 = vpop.f32.mrb[0].mxu0
          %v467 = vadd.f32 %v331, %v466
          %v468 = vpop.f32.mrb[0].mxu0
          %469 = vmatprep.mubr.bf16.mxu0 0
          %470 = vmatmul.mubr.bf16.gmra.mrb[0].mxu0 %v366
          %v471 = vpop.f32.mrb[0].mxu0
          %v472 = vadd.f32 %v331, %v471
          %v473 = vpop.f32.mrb[0].mxu0
          %v474 = vpop.f32.mrb[0].mxu0
          %v475 = vadd.f32 %v331, %v474
          %v476 = vpop.f32.mrb[0].mxu0
          %477 = vmatprep.mubr.bf16.mxu0 0
          %478 = vmatmul.mubr.bf16.gmra.mrb[0].mxu0 %v367
          %v479 = vpop.f32.mrb[0].mxu0
          %v480 = vadd.f32 %v331, %v479
          %v481 = vpop.f32.mrb[0].mxu0
          %v482 = vpop.f32.mrb[0].mxu0
          %v483 = vadd.f32 %v331, %v482
          %v484 = vpop.f32.mrb[0].mxu0
          %485 = vmatprep.mubr.bf16.mxu0 0
          %486 = vmatmul.mubr.bf16.gmra.mrb[0].mxu0 %v368
          %v487 = vpop.f32.mrb[0].mxu0
          %v488 = vadd.f32 %v331, %v487
          %v489 = vpop.f32.mrb[0].mxu0
          %v490 = vpop.f32.mrb[0].mxu0
          %v491 = vadd.f32 %v331, %v490
          %v492 = vpop.f32.mrb[0].mxu0
          %493 = vmatprep.mubr.bf16.mxu0 0
          %494 = vmatmul.mubr.bf16.gmra.mrb[0].mxu0 %v369
          %v495 = vpop.f32.mrb[0].mxu0
          %v496 = vadd.f32 %v331, %v495
          %v497 = vpop.f32.mrb[0].mxu0
          %v498 = vpop.f32.mrb[0].mxu0
          %v499 = vadd.f32 %v331, %v498
          %v500 = vpop.f32.mrb[0].mxu0
          %501 = vmatprep.mubr.bf16.mxu0 0
          %502 = vmatmul.mubr.bf16.gmra.mrb[0].mxu0 %v370
          %v503 = vpop.f32.mrb[0].mxu0
          %v504 = vadd.f32 %v331, %v503
          %v505 = vpop.f32.mrb[0].mxu0
          %v506 = vpop.f32.mrb[0].mxu0
          %v507 = vadd.f32 %v331, %v506
          %v508 = vpop.f32.mrb[0].mxu0
          %509 = vmatprep.mubr.bf16.mxu0 0
          %510 = vmatmul.mubr.bf16.gmra.mrb[0].mxu0 %v371
          %v511 = vpop.f32.mrb[0].mxu0
          %v512 = vadd.f32 %v331, %v511
          %v513 = vpop.f32.mrb[0].mxu0
          %v514 = vpop.f32.mrb[0].mxu0
          %v515 = vadd.f32 %v331, %v514
          %v516 = vpop.f32.mrb[0].mxu0
          %517 = vmatprep.mubr.bf16.mxu0 0
          %518 = vmatmul.mubr.bf16.gmra.mrb[0].mxu0 %v372
          %v519 = vpop.f32.mrb[0].mxu0
          %v520 = vadd.f32 %v331, %v519
          %v521 = vpop.f32.mrb[0].mxu0
          %v522 = vpop.f32.mrb[0].mxu0
          %v523 = vadd.f32 %v331, %v522
          %v524 = vpop.f32.mrb[0].mxu0
          %525 = vdwg.mxu0
          %v526 = vpack.c.bf16 %v467, %v464
          %v527 = vpack.c.bf16 %v475, %v472
          %v528 = vpack.c.bf16 %v483, %v480
          %v529 = vpack.c.bf16 %v491, %v488
          %v530 = vpack.c.bf16 %v499, %v496
          %v531 = vpack.c.bf16 %v507, %v504
          %v532 = vpack.c.bf16 %v515, %v512
          %v533 = vpack.c.bf16 %v523, %v520
          %v534 = vld [vmem:[#allocation8] sm:$0xf]
          %v535 = vld [vmem:[#allocation8 + $0x4] sm:$0xf]
          %v536 = vld [vmem:[#allocation8 + $0x8] sm:$0xf]
          %v537 = vld [vmem:[#allocation8 + $0xc] sm:$0xf]
          %v538 = vld [vmem:[#allocation8 + $0x10] sm:$0xf]
          %v539 = vld [vmem:[#allocation8 + $0x14] sm:$0xf]
          %v540 = vld [vmem:[#allocation8 + $0x18] sm:$0xf]
          %v541 = vld [vmem:[#allocation8 + $0x1c] sm:$0xf]
          %v542 = vld [vmem:[#allocation8 + $0x20] sm:$0xf]
          %v543 = vld [vmem:[#allocation8 + $0x24] sm:$0xf]
          %v544 = vld [vmem:[#allocation8 + $0x28] sm:$0xf]
          %v545 = vld [vmem:[#allocation8 + $0x2c] sm:$0xf]
          %v546 = vld [vmem:[#allocation8 + $0x30] sm:$0xf]
          %v547 = vld [vmem:[#allocation8 + $0x34] sm:$0xf]
          %v548 = vld [vmem:[#allocation8 + $0x38] sm:$0xf]
          %v549 = vld [vmem:[#allocation8 + $0x3c] sm:$0xf]
          %v566 = vunpack.c.l.b16 %v534
          %v567 = vunpack.c.l.b16 %v535
          %v568 = vunpack.c.l.b16 %v536
          %v569 = vunpack.c.l.b16 %v537
          %v570 = vunpack.c.l.b16 %v538
          %v571 = vunpack.c.l.b16 %v539
          %v572 = vunpack.c.l.b16 %v540
          %v573 = vunpack.c.l.b16 %v541
          %v574 = vunpack.c.l.b16 %v542
          %v575 = vunpack.c.l.b16 %v543
          %v576 = vunpack.c.l.b16 %v544
          %v577 = vunpack.c.l.b16 %v545
          %v578 = vunpack.c.l.b16 %v546
          %v579 = vunpack.c.l.b16 %v547
          %v580 = vunpack.c.l.b16 %v548
          %v581 = vunpack.c.l.b16 %v549
          %v582 = vpack.c.b16 %v567, %v566
          %v583 = vpack.c.b16 %v569, %v568
          %v584 = vpack.c.b16 %v571, %v570
          %v585 = vpack.c.b16 %v573, %v572
          %v586 = vpack.c.b16 %v575, %v574
          %v587 = vpack.c.b16 %v577, %v576
          %v588 = vpack.c.b16 %v579, %v578
          %v589 = vpack.c.b16 %v581, %v580
          %598 = vmatprep.subr.bf16.mxu0 0
          %599 = vmatpush1.bf16.msra.mxu0 %v582
          %600 = vmatprep.subr.bf16.mxu0 0
          %601 = vmatpush1.bf16.msra.mxu0 %v583
          %602 = vmatprep.subr.bf16.mxu0 0
          %603 = vmatpush1.bf16.msra.mxu0 %v584
          %604 = vmatprep.subr.bf16.mxu0 0
          %605 = vmatpush1.bf16.msra.mxu0 %v585
          %606 = vmatprep.subr.bf16.mxu0 0
          %607 = vmatpush1.bf16.msra.mxu0 %v586
          %608 = vmatprep.subr.bf16.mxu0 0
          %609 = vmatpush1.bf16.msra.mxu0 %v587
          %610 = vmatprep.subr.bf16.mxu0 0
          %611 = vmatpush1.bf16.msra.mxu0 %v588
          %612 = vmatprep.subr.bf16.mxu0 0
          %613 = vmatpush1.bf16.msra.mxu0 %v589
          %614 = vmatprep.subr.bf16.mxu0 0
          %615 = vmatpush1.bf16.msra.mxu0 0
          %616 = vmatprep.subr.bf16.mxu0 0
          %617 = vmatpush1.bf16.msra.mxu0 0
          %618 = vmatprep.subr.bf16.mxu0 0
          %619 = vmatpush1.bf16.msra.mxu0 0
          %620 = vmatprep.subr.bf16.mxu0 0
          %621 = vmatpush1.bf16.msra.mxu0 0
          %622 = vmatprep.subr.bf16.mxu0 0
          %623 = vmatpush1.bf16.msra.mxu0 0
          %624 = vmatprep.subr.bf16.mxu0 0
          %625 = vmatpush1.bf16.msra.mxu0 0
          %626 = vmatprep.subr.bf16.mxu0 0
          %627 = vmatpush1.bf16.msra.mxu0 0
          %628 = vmatprep.subr.bf16.mxu0 0
          %629 = vmatpush1.bf16.msra.mxu0 0
          %630 = vmatprep.mubr.bf16.mxu0 0
          %631 = vmatmul.mubr.bf16.gmra.mrb[0].mxu0 %v526
          %v632 = vpop.f32.mrb[0].mxu0
          %v633 = vadd.f32 0.0, %v632
          %v634 = vpop.f32.mrb[0].mxu0
          %v635 = vpop.f32.mrb[0].mxu0
          %v636 = vadd.f32 0.0, %v635
          %v637 = vpop.f32.mrb[0].mxu0
          %638 = vmatprep.mubr.bf16.mxu0 0
          %639 = vmatmul.mubr.bf16.gmra.mrb[0].mxu0 %v527
          %v640 = vpop.f32.mrb[0].mxu0
          %v641 = vadd.f32 0.0, %v640
          %v642 = vpop.f32.mrb[0].mxu0
          %v643 = vpop.f32.mrb[0].mxu0
          %v644 = vadd.f32 0.0, %v643
          %v645 = vpop.f32.mrb[0].mxu0
          %646 = vmatprep.mubr.bf16.mxu0 0
          %647 = vmatmul.mubr.bf16.gmra.mrb[0].mxu0 %v528
          %v648 = vpop.f32.mrb[0].mxu0
          %v649 = vadd.f32 0.0, %v648
          %v650 = vpop.f32.mrb[0].mxu0
          %v651 = vpop.f32.mrb[0].mxu0
          %v652 = vadd.f32 0.0, %v651
          %v653 = vpop.f32.mrb[0].mxu0
          %654 = vmatprep.mubr.bf16.mxu0 0
          %655 = vmatmul.mubr.bf16.gmra.mrb[0].mxu0 %v529
          %v656 = vpop.f32.mrb[0].mxu0
          %v657 = vadd.f32 0.0, %v656
          %v658 = vpop.f32.mrb[0].mxu0
          %v659 = vpop.f32.mrb[0].mxu0
          %v660 = vadd.f32 0.0, %v659
          %v661 = vpop.f32.mrb[0].mxu0
          %662 = vmatprep.mubr.bf16.mxu0 0
          %663 = vmatmul.mubr.bf16.gmra.mrb[0].mxu0 %v530
          %v664 = vpop.f32.mrb[0].mxu0
          %v665 = vadd.f32 0.0, %v664
          %v666 = vpop.f32.mrb[0].mxu0
          %v667 = vpop.f32.mrb[0].mxu0
          %v668 = vadd.f32 0.0, %v667
          %v669 = vpop.f32.mrb[0].mxu0
          %670 = vmatprep.mubr.bf16.mxu0 0
          %671 = vmatmul.mubr.bf16.gmra.mrb[0].mxu0 %v531
          %v672 = vpop.f32.mrb[0].mxu0
          %v673 = vadd.f32 0.0, %v672
          %v674 = vpop.f32.mrb[0].mxu0
          %v675 = vpop.f32.mrb[0].mxu0
          %v676 = vadd.f32 0.0, %v675
          %v677 = vpop.f32.mrb[0].mxu0
          %678 = vmatprep.mubr.bf16.mxu0 0
          %679 = vmatmul.mubr.bf16.gmra.mrb[0].mxu0 %v532
          %v680 = vpop.f32.mrb[0].mxu0
          %v681 = vadd.f32 0.0, %v680
          %v682 = vpop.f32.mrb[0].mxu0
          %v683 = vpop.f32.mrb[0].mxu0
          %v684 = vadd.f32 0.0, %v683
          %v685 = vpop.f32.mrb[0].mxu0
          %686 = vmatprep.mubr.bf16.mxu0 0
          %687 = vmatmul.mubr.bf16.gmra.mrb[0].mxu0 %v533
          %v688 = vpop.f32.mrb[0].mxu0
          %v689 = vadd.f32 0.0, %v688
          %v690 = vpop.f32.mrb[0].mxu0
          %v691 = vpop.f32.mrb[0].mxu0
          %v692 = vadd.f32 0.0, %v691
          %v693 = vpop.f32.mrb[0].mxu0
          %694 = vdwg.mxu0
          %v695 = vpack.c.bf16 %v636, %v633
          %v696 = vpack.c.bf16 %v644, %v641
          %v697 = vpack.c.bf16 %v652, %v649
          %v698 = vpack.c.bf16 %v660, %v657
          %v699 = vpack.c.bf16 %v668, %v665
          %v700 = vpack.c.bf16 %v676, %v673
          %v701 = vpack.c.bf16 %v684, %v681
          %v702 = vpack.c.bf16 %v692, %v689
          %s703 = sshra.s32 %s264, 4
          %s704 = sand.u32 %s264, 15
          %s705 = smul.addr %s703, 8
          %s706 = scalar_lea.vmem [#allocation2], %s705
          %707 = vst [vmem:[%s706] sm:$0xff] %v695
          %708 = vst [vmem:[%s706 + $0x8] sm:$0xff] %v696
          %709 = vst [vmem:[%s706 + $0x10] sm:$0xff] %v697
          %710 = vst [vmem:[%s706 + $0x18] sm:$0xff] %v698
          %711 = vst [vmem:[%s706 + $0x20] sm:$0xff] %v699
          %712 = vst [vmem:[%s706 + $0x28] sm:$0xff] %v700
          %713 = vst [vmem:[%s706 + $0x30] sm:$0xff] %v701
          %714 = vst [vmem:[%s706 + $0x38] sm:$0xff] %v702
        $region60: #{tpu_custom_call.1} parent=39 // pred_fallthru
          _
        %p715 = scmp.eq.s32.totalorder %s25, 1
        // Predicated region
        $region61: #{tpu_custom_call.1} parent=39 // pred_check
          %p716 = pneg %p715
        $region62: #{tpu_custom_call.1} parent=39 // pred_check_branch
          %718 = sbr.rel (%p716) target = $region64
        $region63: #{tpu_custom_call.1} parent=39 // pred_region
          %s719 = sshra.s32 %s264, 3
          %s720 = sand.u32 %s264, 7
          %s721 = smul.addr %s719, 4
          %s722 = scalar_lea.vmem [#allocation3], %s721
          %v723 = vld [vmem:[%s722] sm:$0xf]
          %v724 = vld [vmem:[%s722 + $0x4] sm:$0xf]
          %v725 = vld [vmem:[%s722 + $0x8] sm:$0xf]
          %v726 = vld [vmem:[%s722 + $0xc] sm:$0xf]
          %v727 = vld [vmem:[%s722 + $0x10] sm:$0xf]
          %v728 = vld [vmem:[%s722 + $0x14] sm:$0xf]
          %v729 = vld [vmem:[%s722 + $0x18] sm:$0xf]
          %v730 = vld [vmem:[%s722 + $0x1c] sm:$0xf]
          %v731 = vld [vmem:[%s722 + $0x20] sm:$0xf]
          %v732 = vld [vmem:[%s722 + $0x24] sm:$0xf]
          %v733 = vld [vmem:[%s722 + $0x28] sm:$0xf]
          %v734 = vld [vmem:[%s722 + $0x2c] sm:$0xf]
          %v735 = vld [vmem:[%s722 + $0x30] sm:$0xf]
          %v736 = vld [vmem:[%s722 + $0x34] sm:$0xf]
          %v737 = vld [vmem:[%s722 + $0x38] sm:$0xf]
          %v738 = vld [vmem:[%s722 + $0x3c] sm:$0xf]
          %v739 = vld [vmem:[#allocation2] sm:$0xff]
          %v740 = vld [vmem:[#allocation2 + $0x8] sm:$0xff]
          %v741 = vld [vmem:[#allocation2 + $0x10] sm:$0xff]
          %v742 = vld [vmem:[#allocation2 + $0x18] sm:$0xff]
          %v743 = vld [vmem:[#allocation2 + $0x20] sm:$0xff]
          %v744 = vld [vmem:[#allocation2 + $0x28] sm:$0xff]
          %v745 = vld [vmem:[#allocation2 + $0x30] sm:$0xff]
          %v746 = vld [vmem:[#allocation2 + $0x38] sm:$0xff]
          %v747 = vld [vmem:[%s4] sm:$0x1]
          %v749 = vlaneseq
          %v750 = vshrl.u32 %v749, 7
          %v751 = vsub.s32 0, %v750
          %v752 = vrot.slane %v747, %v751
          %v770 = vunpack.c.l.b16 %v723
          %v771 = vunpack.c.l.b16 %v724
          %v772 = vunpack.c.l.b16 %v725
          %v773 = vunpack.c.l.b16 %v726
          %v774 = vunpack.c.l.b16 %v727
          %v775 = vunpack.c.l.b16 %v728
          %v776 = vunpack.c.l.b16 %v729
          %v777 = vunpack.c.l.b16 %v730
          %v778 = vunpack.c.l.b16 %v731
          %v779 = vunpack.c.l.b16 %v732
          %v780 = vunpack.c.l.b16 %v733
          %v781 = vunpack.c.l.b16 %v734
          %v782 = vunpack.c.l.b16 %v735
          %v783 = vunpack.c.l.b16 %v736
          %v784 = vunpack.c.l.b16 %v737
          %v785 = vunpack.c.l.b16 %v738
          %v786 = vpack.c.b16 %v771, %v770
          %v787 = vpack.c.b16 %v773, %v772
          %v788 = vpack.c.b16 %v775, %v774
          %v789 = vpack.c.b16 %v777, %v776
          %v790 = vpack.c.b16 %v779, %v778
          %v791 = vpack.c.b16 %v781, %v780
          %v792 = vpack.c.b16 %v783, %v782
          %v793 = vpack.c.b16 %v785, %v784
          %802 = vmatprep.subr.bf16.mxu0 0
          %803 = vmatpush1.bf16.msra.mxu0 %v739
          %804 = vmatprep.subr.bf16.mxu0 0
          %805 = vmatpush1.bf16.msra.mxu0 %v740
          %806 = vmatprep.subr.bf16.mxu0 0
          %807 = vmatpush1.bf16.msra.mxu0 %v741
          %808 = vmatprep.subr.bf16.mxu0 0
          %809 = vmatpush1.bf16.msra.mxu0 %v742
          %810 = vmatprep.subr.bf16.mxu0 0
          %811 = vmatpush1.bf16.msra.mxu0 %v743
          %812 = vmatprep.subr.bf16.mxu0 0
          %813 = vmatpush1.bf16.msra.mxu0 %v744
          %814 = vmatprep.subr.bf16.mxu0 0
          %815 = vmatpush1.bf16.msra.mxu0 %v745
          %816 = vmatprep.subr.bf16.mxu0 0
          %817 = vmatpush1.bf16.msra.mxu0 %v746
          %818 = vmatprep.subr.bf16.mxu0 0
          %819 = vmatpush1.bf16.msra.mxu0 0
          %820 = vmatprep.subr.bf16.mxu0 0
          %821 = vmatpush1.bf16.msra.mxu0 0
          %822 = vmatprep.subr.bf16.mxu0 0
          %823 = vmatpush1.bf16.msra.mxu0 0
          %824 = vmatprep.subr.bf16.mxu0 0
          %825 = vmatpush1.bf16.msra.mxu0 0
          %826 = vmatprep.subr.bf16.mxu0 0
          %827 = vmatpush1.bf16.msra.mxu0 0
          %828 = vmatprep.subr.bf16.mxu0 0
          %829 = vmatpush1.bf16.msra.mxu0 0
          %830 = vmatprep.subr.bf16.mxu0 0
          %831 = vmatpush1.bf16.msra.mxu0 0
          %832 = vmatprep.subr.bf16.mxu0 0
          %833 = vmatpush1.bf16.msra.mxu0 0
          %834 = vmatprep.mubr.bf16.mxu0 0
          %835 = vmatmul.mubr.bf16.gmra.mrb[0].mxu0 %v786
          %v836 = vpop.f32.mrb[0].mxu0
          %v837 = vadd.f32 %v752, %v836
          %v838 = vpop.f32.mrb[0].mxu0
          %v839 = vpop.f32.mrb[0].mxu0
          %v840 = vadd.f32 %v752, %v839
          %v841 = vpop.f32.mrb[0].mxu0
          %842 = vmatprep.mubr.bf16.mxu0 0
          %843 = vmatmul.mubr.bf16.gmra.mrb[0].mxu0 %v787
          %v844 = vpop.f32.mrb[0].mxu0
          %v845 = vadd.f32 %v752, %v844
          %v846 = vpop.f32.mrb[0].mxu0
          %v847 = vpop.f32.mrb[0].mxu0
          %v848 = vadd.f32 %v752, %v847
          %v849 = vpop.f32.mrb[0].mxu0
          %850 = vmatprep.mubr.bf16.mxu0 0
          %851 = vmatmul.mubr.bf16.gmra.mrb[0].mxu0 %v788
          %v852 = vpop.f32.mrb[0].mxu0
          %v853 = vadd.f32 %v752, %v852
          %v854 = vpop.f32.mrb[0].mxu0
          %v855 = vpop.f32.mrb[0].mxu0
          %v856 = vadd.f32 %v752, %v855
          %v857 = vpop.f32.mrb[0].mxu0
          %858 = vmatprep.mubr.bf16.mxu0 0
          %859 = vmatmul.mubr.bf16.gmra.mrb[0].mxu0 %v789
          %v860 = vpop.f32.mrb[0].mxu0
          %v861 = vadd.f32 %v752, %v860
          %v862 = vpop.f32.mrb[0].mxu0
          %v863 = vpop.f32.mrb[0].mxu0
          %v864 = vadd.f32 %v752, %v863
          %v865 = vpop.f32.mrb[0].mxu0
          %866 = vmatprep.mubr.bf16.mxu0 0
          %867 = vmatmul.mubr.bf16.gmra.mrb[0].mxu0 %v790
          %v868 = vpop.f32.mrb[0].mxu0
          %v869 = vadd.f32 %v752, %v868
          %v870 = vpop.f32.mrb[0].mxu0
          %v871 = vpop.f32.mrb[0].mxu0
          %v872 = vadd.f32 %v752, %v871
          %v873 = vpop.f32.mrb[0].mxu0
          %874 = vmatprep.mubr.bf16.mxu0 0
          %875 = vmatmul.mubr.bf16.gmra.mrb[0].mxu0 %v791
          %v876 = vpop.f32.mrb[0].mxu0
          %v877 = vadd.f32 %v752, %v876
          %v878 = vpop.f32.mrb[0].mxu0
          %v879 = vpop.f32.mrb[0].mxu0
          %v880 = vadd.f32 %v752, %v879
          %v881 = vpop.f32.mrb[0].mxu0
          %882 = vmatprep.mubr.bf16.mxu0 0
          %883 = vmatmul.mubr.bf16.gmra.mrb[0].mxu0 %v792
          %v884 = vpop.f32.mrb[0].mxu0
          %v885 = vadd.f32 %v752, %v884
          %v886 = vpop.f32.mrb[0].mxu0
          %v887 = vpop.f32.mrb[0].mxu0
          %v888 = vadd.f32 %v752, %v887
          %v889 = vpop.f32.mrb[0].mxu0
          %890 = vmatprep.mubr.bf16.mxu0 0
          %891 = vmatmul.mubr.bf16.gmra.mrb[0].mxu0 %v793
          %v892 = vpop.f32.mrb[0].mxu0
          %v893 = vadd.f32 %v752, %v892
          %v894 = vpop.f32.mrb[0].mxu0
          %v895 = vpop.f32.mrb[0].mxu0
          %v896 = vadd.f32 %v752, %v895
          %v897 = vpop.f32.mrb[0].mxu0
          %898 = vdwg.mxu0
          %v899 = vmax.f32 %v837, 0.0
          %v900 = vmax.f32 %v840, 0.0
          %v901 = vmax.f32 %v845, 0.0
          %v902 = vmax.f32 %v848, 0.0
          %v903 = vmax.f32 %v853, 0.0
          %v904 = vmax.f32 %v856, 0.0
          %v905 = vmax.f32 %v861, 0.0
          %v906 = vmax.f32 %v864, 0.0
          %v907 = vmax.f32 %v869, 0.0
          %v908 = vmax.f32 %v872, 0.0
          %v909 = vmax.f32 %v877, 0.0
          %v910 = vmax.f32 %v880, 0.0
          %v911 = vmax.f32 %v885, 0.0
          %v912 = vmax.f32 %v888, 0.0
          %v913 = vmax.f32 %v893, 0.0
          %v914 = vmax.f32 %v896, 0.0
          %915 = vst [vmem:[%s260] sm:$0xff] %v899
          %916 = vst [vmem:[%s260 + $0x8] sm:$0xff] %v900
          %917 = vst [vmem:[%s260 + $0x10] sm:$0xff] %v901
          %918 = vst [vmem:[%s260 + $0x18] sm:$0xff] %v902
          %919 = vst [vmem:[%s260 + $0x20] sm:$0xff] %v903
          %920 = vst [vmem:[%s260 + $0x28] sm:$0xff] %v904
          %921 = vst [vmem:[%s260 + $0x30] sm:$0xff] %v905
          %922 = vst [vmem:[%s260 + $0x38] sm:$0xff] %v906
          %923 = vst [vmem:[%s260 + $0x40] sm:$0xff] %v907
          %924 = vst [vmem:[%s260 + $0x48] sm:$0xff] %v908
          %925 = vst [vmem:[%s260 + $0x50] sm:$0xff] %v909
          %926 = vst [vmem:[%s260 + $0x58] sm:$0xff] %v910
          %927 = vst [vmem:[%s260 + $0x60] sm:$0xff] %v911
          %928 = vst [vmem:[%s260 + $0x68] sm:$0xff] %v912
          %929 = vst [vmem:[%s260 + $0x70] sm:$0xff] %v913
          %930 = vst [vmem:[%s260 + $0x78] sm:$0xff] %v914
        $region64: #{tpu_custom_call.1} parent=39 // pred_fallthru
          _
        %s931 = sand.u32 %s148, 1
        %s932 = scalar_lea.sflag [#allocation5], %s931
        %s933 = sand.u32 %s148, 1
        %s934 = smul.addr %s933, 128
        %s935 = scalar_lea.vmem [#allocation9], %s934
        // Predicated region
        $region65: #{tpu_custom_call.1} parent=39 // pred_check
          %p936 = pneg %p158
        $region66: #{tpu_custom_call.1} parent=39 // pred_check_branch
          %938 = sbr.rel (%p936) target = $region68
        $region67: #{tpu_custom_call.1} parent=39 // pred_region
          %s939 = smul.u32 %s26, %s25
          %s940 = smul.u32 16, %s939
          %s942 = ssub.s32 2048, 2048
          %943 = vsyncadd %s932, %s942
          %s944 = smul.addr %s940, 128
          %s945 = scalar_lea.hbm %s5, %s944
          %s946 = sshll.u32 %s935, 4
          %s947 = int_to_ptr.vmem [resolvable:$true] %s946
          %952 = dma.vmem_to_hbm [thread:$0]  %s947, 2048, %s945, %s932, 128, 128, 8
        $region68: #{tpu_custom_call.1} parent=39 // pred_fallthru
          _
      $region40: #{tpu_custom_call.1} parent=5 // pred_fallthru
        _
      %p953 = scmp.le.s32.totalorder 2, %s16
      // Predicated region
      $region69: #{tpu_custom_call.1} parent=5 // pred_check
        %p954 = pneg %p953
      $region70: #{tpu_custom_call.1} parent=5 // pred_check_branch
        %956 = sbr.rel (%p954) target = $region72
      $region71: #{tpu_custom_call.1} parent=5 // pred_region
        %s957 = ssub.s32 %s16, 2
        // Predicated region
        $region73: #{tpu_custom_call.1} parent=71 // pred_check
          %p958 = pneg %p164
        $region74: #{tpu_custom_call.1} parent=71 // pred_check_branch
          %960 = sbr.rel (%p958) target = $region76
        $region75: #{tpu_custom_call.1} parent=71 // pred_region
          %s961 = sand.u32 %s149, 1
          %s962 = scalar_lea.sflag [#allocation5], %s961
          %s963 = sand.u32 %s149, 1
          %s964 = smul.addr %s963, 128
          %s965 = scalar_lea.vmem [#allocation9], %s964
          %966 = dma.done %s962, 2048
        $region76: #{tpu_custom_call.1} parent=71 // pred_fallthru
          _
      $region72: #{tpu_custom_call.1} parent=5 // pred_fallthru
        _
    $region6: #{tpu_custom_call.1} parent=1 // loop_footer
      %s20 = sadd.s32 1, %s16
    $region7: #{tpu_custom_call.1} parent=1 // loop_footer_branch
      %15 = sbr.rel target = $region3
    $region8: #{tpu_custom_call.1} parent=1 // loop_exit
      _
    %967 = vsyncpa [#allocation4], 1
    %s968 = scalar_lea.sflag [#allocation4], 1
    %969 = vsyncpa %s968, 1
    %970 = vsyncpa [#allocation7], 1
    %971 = vsyncpa [#allocation5], 1
    %s972 = scalar_lea.sflag [#allocation5], 1
    %973 = vsyncpa %s972, 1

</llo_original>
